<compile_context>
chip_gen: v7x
topology: tpu7x:2x2x1
jax: 0.10.0
libtpu: 0.0.40
codegen_flags: <defaults>
</compile_context>

<pallas_src>
import functools

import jax
import jax.numpy as jnp
from jax.experimental import pallas as pl
from jax.experimental.pallas import tpu as pltpu

EPS = 1e-5
MATMUL_DTYPE = jnp.bfloat16   # MXU inputs; accumulation + BN math stay f32.

_COMPILER_PARAMS = pltpu.CompilerParams(
    dimension_semantics=("parallel",),
    vmem_limit_bytes=32 * 1024 * 1024,   # conservative for v7x's 64 MiB VMEM
)


def _pick_tile(m, target=512):
    """Largest multiple-of-8 divisor of m that is <= target (fallback: m)."""
    t = min(target, m)
    t -= t % 8
    while t >= 8:
        if m % t == 0:
            return t
        t -= 8
    return m


def _bn_scale_shift(s, ss, count, gamma, beta):
    """Fold batch stats (sum, sum of squares) + affine into y*scale + shift."""
    mean = s / count
    var = ss / count - mean * mean          # biased variance (training mode)
    scale = gamma * jax.lax.rsqrt(var + EPS)
    shift = beta - mean * scale
    return scale, shift                     # each (1, C) float32


# --------------------------------------------------------------------------
# Pass 1: fused conv1 + shortcut 1x1 matmul, plus per-tile BN partial stats.
# --------------------------------------------------------------------------
def _matmul_stats_kernel(x_ref, w_ref, y1_ref, sc_ref, st_ref, *, split):
    y = jnp.dot(x_ref[...], w_ref[...], preferred_element_type=jnp.float32)
    y1_ref[...] = y[:, :split]
    sc_ref[...] = y[:, split:]
    s = jnp.sum(y, axis=0, keepdims=True)
    ss = jnp.sum(y * y, axis=0, keepdims=True)
    st_ref[0] = jnp.concatenate([s, ss], axis=0)


# --------------------------------------------------------------------------
# Pass 2: bn1 + relu, 3x3 conv (per image, roll-based im2col), partial stats.
# --------------------------------------------------------------------------
def _conv3x3_stats_kernel(y1_ref, w2_ref, a_ref, b_ref, y2_ref, st_ref, *, H, W):
    HW = H * W
    P = y1_ref.shape[-1]

    # bn1 (precomputed scale/shift) + relu, in f32.
    y1 = jnp.maximum(y1_ref[0] * a_ref[...] + b_ref[...], 0.0)      # (HW, P)

    row = jax.lax.broadcasted_iota(jnp.int32, (HW, P), 0)
    hh = row // W
    ww = row % W

    cols = []
    for dy in (-1, 0, 1):
        for dx in (-1, 0, 1):
            s = dy * W + dx
            shifted = pltpu.roll(y1, (-s) % HW, 0) if s != 0 else y1
            mask = None
            if dy == -1:
                mask = hh >= 1
            elif dy == 1:
                mask = hh <= H - 2
            if dx == -1:
                mask = (ww >= 1) if mask is None else (mask & (ww >= 1))
            elif dx == 1:
                mask = (ww <= W - 2) if mask is None else (mask & (ww <= W - 2))
            if mask is not None:
                shifted = jnp.where(mask, shifted, 0.0)
            cols.append(shifted)

    # im2col: one K = 9*P matmul instead of 9 under-filled K = P dots.
    patches = jnp.concatenate(cols, axis=1).astype(MATMUL_DTYPE)     # (HW, 9P)
    y2 = jnp.dot(patches, w2_ref[...], preferred_element_type=jnp.float32)

    y2_ref[0] = y2
    s_ = jnp.sum(y2, axis=0, keepdims=True)
    ss = jnp.sum(y2 * y2, axis=0, keepdims=True)
    st_ref[0] = jnp.concatenate([s_, ss], axis=0)


# --------------------------------------------------------------------------
# Pass 3: bn2 + relu, conv3 (1x1) matmul, partial stats.
# --------------------------------------------------------------------------
def _bn_matmul_stats_kernel(x_ref, w_ref, a_ref, b_ref, y_ref, st_ref):
    x = jnp.maximum(x_ref[...] * a_ref[...] + b_ref[...], 0.0)
    y = jnp.dot(x.astype(MATMUL_DTYPE), w_ref[...],
                preferred_element_type=jnp.float32)
    y_ref[...] = y
    s = jnp.sum(y, axis=0, keepdims=True)
    ss = jnp.sum(y * y, axis=0, keepdims=True)
    st_ref[0] = jnp.concatenate([s, ss], axis=0)


# --------------------------------------------------------------------------
# Pass 4: bn3 + bn_shortcut + residual add + relu (lane-dense elementwise).
# --------------------------------------------------------------------------
def _epilogue_kernel(y3_ref, sc_ref, a3_ref, b3_ref, as_ref, bs_ref, out_ref):
    out_ref[...] = jnp.maximum(
        y3_ref[...] * a3_ref[...] + b3_ref[...]
        + sc_ref[...] * as_ref[...] + bs_ref[...], 0.0)


def bottleneck_forward(x, params, *, row_tile=None, out_row_tile=None):
    N, H, W, Cin = x.shape
    P = params["w1"].shape[1]
    Cout = params["w3"].shape[1]
    M = N * H * W
    NH = N * H
    C1 = P + Cout
    f32 = jnp.float32

    tm = row_tile or _pick_tile(M)
    tr = out_row_tile or _pick_tile(NH)
    assert M % tm == 0, "row_tile must divide N*H*W"
    assert NH % tr == 0, "out_row_tile must divide N*H"

    # Pre-cast weights once; fuse conv1 + shortcut weights along out-channels.
    wf = jnp.concatenate([params["w1"], params["ws"]], axis=1).astype(MATMUL_DTYPE)
    w2f = params["w2"].reshape(9 * P, P).astype(MATMUL_DTYPE)   # (ky,kx,cin) major
    w3 = params["w3"].astype(MATMUL_DTYPE)

    x2d = x.reshape(M, Cin).astype(MATMUL_DTYPE)

    # ---- pass 1: x @ [w1 | ws] -------------------------------------------
    n1 = M // tm
    y1_raw, sc_raw, st1 = pl.pallas_call(
        functools.partial(_matmul_stats_kernel, split=P),
        grid=(n1,),
        in_specs=[pl.BlockSpec((tm, Cin), lambda i: (i, 0)),
                  pl.BlockSpec((Cin, C1), lambda i: (0, 0))],
        out_specs=(pl.BlockSpec((tm, P), lambda i: (i, 0)),
                   pl.BlockSpec((tm, Cout), lambda i: (i, 0)),
                   pl.BlockSpec((1, 2, C1), lambda i: (i, 0, 0))),
        out_shape=(jax.ShapeDtypeStruct((M, P), f32),
                   jax.ShapeDtypeStruct((M, Cout), f32),
                   jax.ShapeDtypeStruct((n1, 2, C1), f32)),
        compiler_params=_COMPILER_PARAMS,
    )(x2d, wf)

    st1 = st1.sum(axis=0)                                   # (2, C1)
    a1, b1 = _bn_scale_shift(st1[0, :P], st1[1, :P], M, params["g1"], params["b1"])
    a_s, b_s = _bn_scale_shift(st1[0, P:], st1[1, P:], M, params["gs"], params["bs"])

    # ---- pass 2: bn1 + relu + 3x3 conv (per image) -------------------------
    y1_img = y1_raw.reshape(N, H * W, P)
    y2_raw, st2 = pl.pallas_call(
        functools.partial(_conv3x3_stats_kernel, H=H, W=W),
        grid=(N,),
        in_specs=[pl.BlockSpec((1, H * W, P), lambda n: (n, 0, 0)),
                  pl.BlockSpec((9 * P, P), lambda n: (0, 0)),
                  pl.BlockSpec((1, P), lambda n: (0, 0)),
                  pl.BlockSpec((1, P), lambda n: (0, 0))],
        out_specs=(pl.BlockSpec((1, H * W, P), lambda n: (n, 0, 0)),
                   pl.BlockSpec((1, 2, P), lambda n: (n, 0, 0))),
        out_shape=(jax.ShapeDtypeStruct((N, H * W, P), f32),
                   jax.ShapeDtypeStruct((N, 2, P), f32)),
        compiler_params=_COMPILER_PARAMS,
    )(y1_img, w2f, a1, b1)

    st2 = st2.sum(axis=0)
    a2, b2 = _bn_scale_shift(st2[0], st2[1], M, params["g2"], params["b2"])

    # ---- pass 3: bn2 + relu + conv3 (1x1) ----------------------------------
    y2_flat = y2_raw.reshape(M, P)
    n3 = M // tm
    y3_raw, st3 = pl.pallas_call(
        _bn_matmul_stats_kernel,
        grid=(n3,),
        in_specs=[pl.BlockSpec((tm, P), lambda i: (i, 0)),
                  pl.BlockSpec((P, Cout), lambda i: (0, 0)),
                  pl.BlockSpec((1, P), lambda i: (0, 0)),
                  pl.BlockSpec((1, P), lambda i: (0, 0))],
        out_specs=(pl.BlockSpec((tm, Cout), lambda i: (i, 0)),
                   pl.BlockSpec((1, 2, Cout), lambda i: (i, 0, 0))),
        out_shape=(jax.ShapeDtypeStruct((M, Cout), f32),
                   jax.ShapeDtypeStruct((n3, 2, Cout), f32)),
        compiler_params=_COMPILER_PARAMS,
    )(y2_flat, w3, a2, b2)

    st3 = st3.sum(axis=0)
    a3, b3 = _bn_scale_shift(st3[0], st3[1], M, params["g3"], params["b3"])

    # ---- pass 4: lane-dense epilogue ---------------------------------------
    WC = W * Cout
    y3_2d = y3_raw.reshape(NH, WC)          # contiguous reshapes: zero cost
    sc_2d = sc_raw.reshape(NH, WC)
    a3_t, b3_t = jnp.tile(a3, (1, W)), jnp.tile(b3, (1, W))
    as_t, bs_t = jnp.tile(a_s, (1, W)), jnp.tile(b_s, (1, W))

    out2d = pl.pallas_call(
        _epilogue_kernel,
        grid=(NH // tr,),
        in_specs=[pl.BlockSpec((tr, WC), lambda i: (i, 0)),
                  pl.BlockSpec((tr, WC), lambda i: (i, 0)),
                  pl.BlockSpec((1, WC), lambda i: (0, 0)),
                  pl.BlockSpec((1, WC), lambda i: (0, 0)),
                  pl.BlockSpec((1, WC), lambda i: (0, 0)),
                  pl.BlockSpec((1, WC), lambda i: (0, 0))],
        out_specs=pl.BlockSpec((tr, WC), lambda i: (i, 0)),
        out_shape=jax.ShapeDtypeStruct((NH, WC), f32),
        compiler_params=_COMPILER_PARAMS,
    )(y3_2d, sc_2d, a3_t, b3_t, as_t, bs_t)

    return out2d.reshape(N, H, W, Cout)


# --------------------------------------------------------------------------
# Pure-JAX reference with identical math (bf16 matmul inputs, f32 accumulation,
# one-pass training-mode BN stats) for the correctness check.
# --------------------------------------------------------------------------
def bottleneck_reference(x, params):
    N, H, W, Cin = x.shape
    P = params["w1"].shape[1]
    Cout = params["w3"].shape[1]
    M = N * H * W

    def bn(y, gamma, beta, relu):
        s = jnp.sum(y, axis=0)
        ss = jnp.sum(y * y, axis=0)
        scale, shift = _bn_scale_shift(s, ss, M, gamma, beta)
        out = y * scale + shift
        return jnp.maximum(out, 0.0) if relu else out

    x2d = x.reshape(M, Cin).astype(MATMUL_DTYPE)
    wf = jnp.concatenate([params["w1"], params["ws"]], axis=1).astype(MATMUL_DTYPE)
    y = jnp.dot(x2d, wf, preferred_element_type=jnp.float32)
    y1 = bn(y[:, :P], params["g1"], params["b1"], relu=True)
    sc = bn(y[:, P:], params["gs"], params["bs"], relu=False)

    pad = jnp.pad(y1.reshape(N, H, W, P), ((0, 0), (1, 1), (1, 1), (0, 0)))
    w2 = params["w2"].astype(MATMUL_DTYPE)
    acc = jnp.zeros((M, P), jnp.float32)
    for ky in range(3):
        for kx in range(3):
            win = pad[:, ky:ky + H, kx:kx + W, :].reshape(M, P).astype(MATMUL_DTYPE)
            acc = acc + jnp.dot(win, w2[ky, kx], preferred_element_type=jnp.float32)
    y2 = bn(acc, params["g2"], params["b2"], relu=True)

    y3 = jnp.dot(y2.astype(MATMUL_DTYPE), params["w3"].astype(MATMUL_DTYPE),
                 preferred_element_type=jnp.float32)
    y3 = bn(y3, params["g3"], params["b3"], relu=False)
    return jnp.maximum(y3 + sc, 0.0).reshape(N, H, W, Cout)


def init_params(key, in_planes, planes):
    expansion = 4
    out_planes = expansion * planes
    ks = jax.random.split(key, 12)

    def bn_params(kg, kb, c):
        gamma = 1.0 + 0.1 * jax.random.normal(kg, (1, c), jnp.float32)
        beta = 0.1 * jax.random.normal(kb, (1, c), jnp.float32)
        return gamma, beta

    g1, b1 = bn_params(ks[4], ks[5], planes)
    g2, b2 = bn_params(ks[6], ks[7], planes)
    g3, b3 = bn_params(ks[8], ks[9], out_planes)
    gs, bs = bn_params(ks[10], ks[11], out_planes)
    return {
        "w1": 0.1 * jax.random.normal(ks[0], (in_planes, planes), jnp.float32),
        "w2": 0.1 * jax.random.normal(ks[1], (3, 3, planes, planes), jnp.float32),
        "w3": 0.1 * jax.random.normal(ks[2], (planes, out_planes), jnp.float32),
        "ws": 0.1 * jax.random.normal(ks[3], (in_planes, out_planes), jnp.float32),
        "g1": g1, "b1": b1, "g2": g2, "b2": b2,
        "g3": g3, "b3": b3, "gs": gs, "bs": bs,
    }


if __name__ == "__main__":
    # Small shapes consistent with Bottleneck(in_planes=16, planes=8, stride=1);
    # the shortcut conv+BN path is active because in_planes != 4*planes.
    # Note: channel dims this small badly under-fill the MXU; the kernel is
    # only perf-sensible for planes >= 32 / in_planes >= 128.
    N, H, W = 2, 8, 8
    in_planes, planes = 16, 8

    key = jax.random.PRNGKey(0)
    kx, kp = jax.random.split(key)
    x = jax.random.normal(kx, (N, H, W, in_planes), jnp.float32)   # NHWC
    params = init_params(kp, in_planes, planes)

    # Small explicit tiles so every grid in the demo has >= 2 steps.
    out = bottleneck_forward(x, params, row_tile=64, out_row_tile=8)
    out = jax.block_until_ready(out)

    ref = bottleneck_reference(x, params)
    assert out.shape == (N, H, W, 4 * planes)
    err = jnp.max(jnp.abs(out - ref))
    assert jnp.allclose(out, ref, atol=5e-3, rtol=5e-3), f"max abs err {err}"

    print("KERNEL_OK")
</pallas_src>

<mosaic_0001>
module attributes {stable_mosaic.version = 11 : i64} {
  func.func @_matmul_stats_kernel(%arg0: i32, %arg1: memref<64x16xbf16, #tpu.memory_space<vmem>>, %arg2: memref<16x40xbf16, #tpu.memory_space<vmem>>, %arg3: memref<64x8xf32, #tpu.memory_space<vmem>>, %arg4: memref<64x32xf32, #tpu.memory_space<vmem>>, %arg5: memref<1x2x40xf32, #tpu.memory_space<vmem>>) attributes {dimension_semantics = [#tpu.dimension_semantics<parallel>], iteration_bounds = array<i64: 2>, scalar_prefetch = 0 : i64, scratch_operands = 0 : i64, tpu.core_type = #tpu.core_type<tc>, window_params = [{transform_indices = @transform_0, window_bounds = array<i64: 64, 16>}, {pipeline_mode = #tpu.pipeline_mode<synchronous>, transform_indices = @transform_1, window_bounds = array<i64: 16, 40>}, {transform_indices = @transform_2, window_bounds = array<i64: 64, 8>}, {transform_indices = @transform_3, window_bounds = array<i64: 64, 32>}, {transform_indices = @transform_4, window_bounds = array<i64: 1, 2, 40>}]} {
    %c0 = arith.constant 0 : index
    %c0_0 = arith.constant 0 : index
    %0 = vector.load %arg1[%c0, %c0_0] : memref<64x16xbf16, #tpu.memory_space<vmem>>, vector<64x16xbf16>
    %c0_1 = arith.constant 0 : index
    %c0_2 = arith.constant 0 : index
    %1 = vector.load %arg2[%c0_1, %c0_2] : memref<16x40xbf16, #tpu.memory_space<vmem>>, vector<16x40xbf16>
    %cst = arith.constant dense<0.000000e+00> : vector<64x40xf32>
    %2 = tpu.matmul %0, %1, %cst {dimension_numbers = #tpu.dot_dimension_numbers<[1], [0], [0], [1], [0, 0, 1, 1], [], []>} : vector<64x16xbf16>, vector<16x40xbf16>, vector<64x40xf32> -> vector<64x40xf32>
    %3 = vector.extract_strided_slice %2 {offsets = [0, 0], sizes = [64, 8], strides = [1, 1]} : vector<64x40xf32> to vector<64x8xf32>
    %c0_3 = arith.constant 0 : index
    %c0_4 = arith.constant 0 : index
    %4 = vector.load %arg3[%c0_3, %c0_4] : memref<64x8xf32, #tpu.memory_space<vmem>>, vector<64x8xf32>
    tpu.vector_store %arg3[%c0_3, %c0_4], %3 {strides = array<i32>} : memref<64x8xf32, #tpu.memory_space<vmem>>, vector<64x8xf32>,
    %5 = vector.extract_strided_slice %2 {offsets = [0, 8], sizes = [64, 32], strides = [1, 1]} : vector<64x40xf32> to vector<64x32xf32>
    %c0_5 = arith.constant 0 : index
    %c0_6 = arith.constant 0 : index
    %6 = vector.load %arg4[%c0_5, %c0_6] : memref<64x32xf32, #tpu.memory_space<vmem>>, vector<64x32xf32>
    tpu.vector_store %arg4[%c0_5, %c0_6], %5 {strides = array<i32>} : memref<64x32xf32, #tpu.memory_space<vmem>>, vector<64x32xf32>,
    %cst_7 = arith.constant dense<0.000000e+00> : vector<40xf32>
    %7 = vector.multi_reduction <add>, %2, %cst_7 [0] : vector<64x40xf32> to vector<40xf32>
    %8 = vector.shape_cast %7 : vector<40xf32> to vector<1x40xf32>
    %9 = arith.mulf %2, %2 : vector<64x40xf32>
    %cst_8 = arith.constant dense<0.000000e+00> : vector<40xf32>
    %10 = vector.multi_reduction <add>, %9, %cst_8 [0] : vector<64x40xf32> to vector<40xf32>
    %11 = vector.shape_cast %10 : vector<40xf32> to vector<1x40xf32>
    %12 = tpu.concatenate %8, %11 in 0 : vector<1x40xf32>, vector<1x40xf32> -> vector<2x40xf32>
    %c0_9 = arith.constant 0 : index
    %c0_10 = arith.constant 0 : index
    %c0_11 = arith.constant 0 : index
    %13 = vector.load %arg5[%c0_9, %c0_10, %c0_11] : memref<1x2x40xf32, #tpu.memory_space<vmem>>, vector<1x2x40xf32>
    %14 = vector.shape_cast %13 : vector<1x2x40xf32> to vector<2x40xf32>
    %15 = vector.shape_cast %12 : vector<2x40xf32> to vector<1x2x40xf32>
    tpu.vector_store %arg5[%c0_9, %c0_10, %c0_11], %15 {strides = array<i32>} : memref<1x2x40xf32, #tpu.memory_space<vmem>>, vector<1x2x40xf32>,
    return
  }
  func.func @transform_0(%arg0: i32) -> (i32, i32) {
    %c0_i32 = arith.constant 0 : i32
    %c0_i32_0 = arith.constant 0 : i32
    return %arg0, %c0_i32 : i32, i32
  }
  func.func @transform_1(%arg0: i32) -> (i32, i32) {
    %c0_i32 = arith.constant 0 : i32
    %c0_i32_0 = arith.constant 0 : i32
    %c0_i32_1 = arith.constant 0 : i32
    return %c0_i32, %c0_i32_0 : i32, i32
  }
  func.func @transform_2(%arg0: i32) -> (i32, i32) {
    %c0_i32 = arith.constant 0 : i32
    %c0_i32_0 = arith.constant 0 : i32
    return %arg0, %c0_i32 : i32, i32
  }
  func.func @transform_3(%arg0: i32) -> (i32, i32) {
    %c0_i32 = arith.constant 0 : i32
    %c0_i32_0 = arith.constant 0 : i32
    return %arg0, %c0_i32 : i32, i32
  }
  func.func @transform_4(%arg0: i32) -> (i32, i32, i32) {
    %c0_i32 = arith.constant 0 : i32
    %c0_i32_0 = arith.constant 0 : i32
    %c0_i32_1 = arith.constant 0 : i32
    return %arg0, %c0_i32, %c0_i32_0 : i32, i32, i32
  }
}

</mosaic_0001>

<llo_original>
// kernel: tpu_custom_call.1
$region0: #{tpu_custom_call.1}
  #allocation0 [shape = 'u32[]', space=smem, size = 0x4, offset = 0x4, fixed_abs, tag = 'smem constant byte address 0x4 - core index']
  #allocation1 [shape = 'u32[144,128]{1,0:T(1,128)}', space=vmem, size = 0x12000, scoped, tag = 'internal scratch']
  %s0 = inlined_call_operand.vmem [shape: bf16[128,16], index: 0, kind: input, shape index: {}]
  %s1 = inlined_call_operand.vmem [shape: bf16[16,40], index: 1, kind: input, shape index: {}]
  %s2 = inlined_call_operand.vmem [shape: f32[128,8], index: 2, kind: output, shape index: {0}]
  %s3 = inlined_call_operand.vmem [shape: f32[128,32], index: 3, kind: output, shape index: {1}]
  %s4 = inlined_call_operand.hbm [shape: f32[2,2,40], index: 4, kind: output, shape index: {2}]
  %5 = xla_tuple %s2, %s3, %s4
  %s6 = sld [smem:[#allocation0]]
  $region57: #{tpu_custom_call.1} parent=0
    _
  %s8 = ssub.s32 1, %s6
  %s9 = scalar_select 0, %s8, %s6
  $region1: #{tpu_custom_call.1} parent=0
    #allocation2 [shape = 'u8[2048]{0}', space=vmem, size = 0x800, scoped, tag = 'output window, operand 2']
    #allocation3 [shape = 's32[2]{0}', space=sflag, size = 0x8, scoped, tag = 'scoped memory for tpu_custom_call.1']
    %10 = vsyncpa [#allocation3], 0
    %s11 = scalar_lea.sflag [#allocation3], 1
    %12 = vsyncpa %s11, 0
    loop: start=0, step=1, limit=4
    $region2: #{tpu_custom_call.1} parent=1 // loop_pre_header
      _
    $region3: #{tpu_custom_call.1} parent=1 // loop_header
      %s14 = sphi 0, %s18
      %p15 = scmp.ge.s32.totalorder %s14, 4
      %s24 = sphi 0, %s26
      %s27 = sphi 0, %s24
      %s28 = sphi 0, %s27
      %s44 = sphi 0, %s28
      %s48 = sphi 0, %s48
      %s50 = sphi 0, %s48
      %s51 = sphi 0, %s50
      %s65 = sphi 0, %s51
      %s71 = sphi 0, %s73
      %s74 = sphi 0, %s71
      %s75 = sphi 0, %s74
      %s91 = sphi 0, %s75
      %s97 = sphi 0, %s99
      %s100 = sphi 0, %s97
      %s101 = sphi 0, %s100
      %s117 = sphi 0, %s101
      %s123 = sphi 0, %s125
      %s126 = sphi 0, %s123
      %s127 = sphi 0, %s126
      %s143 = sphi 0, %s127
    $region4: #{tpu_custom_call.1} parent=1 // loop_header_branch
      %17 = sbr.rel (%p15) target = $region8
    $region5: #{tpu_custom_call.1} parent=1 // loop_body
      %s19 = ssub.s32 %s14, 1
      %s20 = ssub.s32 %s14, 2
      %s21 = sadd.s32 %s14, 1
      %s22 = ssub.s32 %s14, %s21
      %p23 = scmp.eq.s32.totalorder %s22, 0
      %s25 = sadd.s32 %s24, 1
      %s26 = scalar_select %p23, %s24, %s25
      %p29 = pneg %p23
      %p30 = scmp.eq.s32.totalorder %s14, 1
      %p31 = por %p29, %p30
      %p32 = scmp.ne.s32.totalorder %s24, %s27
      %p33 = scmp.eq.s32.totalorder %s14, 0
      %p34 = por %p32, %p33
      %p35 = scmp.ne.s32.totalorder %s24, %s27
      %p36 = scmp.eq.s32.totalorder %s19, 1
      %p37 = por %p35, %p36
      %p38 = scmp.ne.s32.totalorder %s27, %s28
      %p39 = scmp.eq.s32.totalorder %s19, 0
      %p40 = por %p38, %p39
      %p41 = scmp.ne.s32.totalorder %s27, %s28
      %p42 = scmp.eq.s32.totalorder %s20, 1
      %p43 = por %p41, %p42
      %p45 = scmp.ne.s32.totalorder %s28, %s44
      %p46 = scmp.eq.s32.totalorder %s20, 0
      %p47 = por %p45, %p46
      %s49 = sadd.s32 %s48, 1
      %p52 = scmp.eq.s32.totalorder %s14, 1
      %p53 = scmp.ne.s32.totalorder %s48, %s50
      %p54 = scmp.eq.s32.totalorder %s14, 0
      %p55 = por %p53, %p54
      %p56 = scmp.ne.s32.totalorder %s48, %s50
      %p57 = scmp.eq.s32.totalorder %s19, 1
      %p58 = por %p56, %p57
      %p59 = scmp.ne.s32.totalorder %s50, %s51
      %p60 = scmp.eq.s32.totalorder %s19, 0
      %p61 = por %p59, %p60
      %p62 = scmp.ne.s32.totalorder %s50, %s51
      %p63 = scmp.eq.s32.totalorder %s20, 1
      %p64 = por %p62, %p63
      %p66 = scmp.ne.s32.totalorder %s51, %s65
      %p67 = scmp.eq.s32.totalorder %s20, 0
      %p68 = por %p66, %p67
      %s69 = ssub.s32 %s14, %s21
      %p70 = scmp.eq.s32.totalorder %s69, 0
      %s72 = sadd.s32 %s71, 1
      %s73 = scalar_select %p70, %s71, %s72
      %p76 = pneg %p70
      %p77 = scmp.eq.s32.totalorder %s14, 1
      %p78 = por %p76, %p77
      %p79 = scmp.ne.s32.totalorder %s71, %s74
      %p80 = scmp.eq.s32.totalorder %s14, 0
      %p81 = por %p79, %p80
      %p82 = scmp.ne.s32.totalorder %s71, %s74
      %p83 = scmp.eq.s32.totalorder %s19, 1
      %p84 = por %p82, %p83
      %p85 = scmp.ne.s32.totalorder %s74, %s75
      %p86 = scmp.eq.s32.totalorder %s19, 0
      %p87 = por %p85, %p86
      %p88 = scmp.ne.s32.totalorder %s74, %s75
      %p89 = scmp.eq.s32.totalorder %s20, 1
      %p90 = por %p88, %p89
      %p92 = scmp.ne.s32.totalorder %s75, %s91
      %p93 = scmp.eq.s32.totalorder %s20, 0
      %p94 = por %p92, %p93
      %s95 = ssub.s32 %s14, %s21
      %p96 = scmp.eq.s32.totalorder %s95, 0
      %s98 = sadd.s32 %s97, 1
      %s99 = scalar_select %p96, %s97, %s98
      %p102 = pneg %p96
      %p103 = scmp.eq.s32.totalorder %s14, 1
      %p104 = por %p102, %p103
      %p105 = scmp.ne.s32.totalorder %s97, %s100
      %p106 = scmp.eq.s32.totalorder %s14, 0
      %p107 = por %p105, %p106
      %p108 = scmp.ne.s32.totalorder %s97, %s100
      %p109 = scmp.eq.s32.totalorder %s19, 1
      %p110 = por %p108, %p109
      %p111 = scmp.ne.s32.totalorder %s100, %s101
      %p112 = scmp.eq.s32.totalorder %s19, 0
      %p113 = por %p111, %p112
      %p114 = scmp.ne.s32.totalorder %s100, %s101
      %p115 = scmp.eq.s32.totalorder %s20, 1
      %p116 = por %p114, %p115
      %p118 = scmp.ne.s32.totalorder %s101, %s117
      %p119 = scmp.eq.s32.totalorder %s20, 0
      %p120 = por %p118, %p119
      %s121 = ssub.s32 %s14, %s21
      %p122 = scmp.eq.s32.totalorder %s121, 0
      %s124 = sadd.s32 %s123, 1
      %s125 = scalar_select %p122, %s123, %s124
      %p128 = pneg %p122
      %p129 = scmp.eq.s32.totalorder %s14, 1
      %p130 = por %p128, %p129
      %p131 = scmp.ne.s32.totalorder %s123, %s126
      %p132 = scmp.eq.s32.totalorder %s14, 0
      %p133 = por %p131, %p132
      %p134 = scmp.ne.s32.totalorder %s123, %s126
      %p135 = scmp.eq.s32.totalorder %s19, 1
      %p136 = por %p134, %p135
      %p137 = scmp.ne.s32.totalorder %s126, %s127
      %p138 = scmp.eq.s32.totalorder %s19, 0
      %p139 = por %p137, %p138
      %p140 = scmp.ne.s32.totalorder %s126, %s127
      %p141 = scmp.eq.s32.totalorder %s20, 1
      %p142 = por %p140, %p141
      %p144 = scmp.ne.s32.totalorder %s127, %s143
      %p145 = scmp.eq.s32.totalorder %s20, 0
      %p146 = por %p144, %p145
      %p147 = scmp.le.s32.totalorder 1, %s14
      %p148 = scmp.lt.s32.totalorder %s14, 3
      %p149 = pnand %p147, %p148
      %p150 = pneg %p149
      // Predicated region
      $region9: #{tpu_custom_call.1} parent=5 // pred_check
        _
      $region10: #{tpu_custom_call.1} parent=5 // pred_check_branch
        %152 = sbr.rel (%p149) target = $region12
      $region11: #{tpu_custom_call.1} parent=5 // pred_region
        %s153 = ssub.s32 %s14, 1
        // Predicated region
        $region13: #{tpu_custom_call.1} parent=11 // pred_check
          %p154 = pneg %p61
        $region14: #{tpu_custom_call.1} parent=11 // pred_check_branch
          %156 = sbr.rel (%p154) target = $region16
        $region15: #{tpu_custom_call.1} parent=11 // pred_region
          _
        $region16: #{tpu_custom_call.1} parent=11 // pred_fallthru
          _
      $region12: #{tpu_custom_call.1} parent=5 // pred_fallthru
        _
      %p157 = scmp.lt.s32.totalorder %s14, 2
      // Predicated region
      $region17: #{tpu_custom_call.1} parent=5 // pred_check
        %p158 = pneg %p157
      $region18: #{tpu_custom_call.1} parent=5 // pred_check_branch
        %160 = sbr.rel (%p158) target = $region20
      $region19: #{tpu_custom_call.1} parent=5 // pred_region
        // Predicated region
        $region21: #{tpu_custom_call.1} parent=19 // pred_check
          %p161 = pneg %p34
        $region22: #{tpu_custom_call.1} parent=19 // pred_check_branch
          %163 = sbr.rel (%p161) target = $region24
        $region23: #{tpu_custom_call.1} parent=19 // pred_region
          %s164 = smul.u32 8, %s14
          %p165 = scmp.lt.s32.totalorder %s164, 15
          %s166 = scalar_select %p165, %s164, 15
          %s167 = smul.addr %s166, 4
          %s168 = scalar_lea.vmem %s0, %s167
          %s169 = smul.u32 8, %s14
        $region24: #{tpu_custom_call.1} parent=19 // pred_fallthru
          _
      $region20: #{tpu_custom_call.1} parent=5 // pred_fallthru
        _
      %p170 = scmp.le.s32.totalorder 1, %s14
      %p171 = scmp.lt.s32.totalorder %s14, 3
      %p172 = pnand %p170, %p171
      %p173 = pneg %p172
      // Predicated region
      $region25: #{tpu_custom_call.1} parent=5 // pred_check
        _
      $region26: #{tpu_custom_call.1} parent=5 // pred_check_branch
        %175 = sbr.rel (%p172) target = $region28
      $region27: #{tpu_custom_call.1} parent=5 // pred_region
        %s176 = ssub.s32 %s14, 1
        %s177 = smul.u32 8, %s19
        %p178 = scmp.lt.s32.totalorder %s177, 15
        %s179 = scalar_select %p178, %s177, 15
        %s180 = smul.addr %s179, 4
        %s181 = scalar_lea.vmem %s0, %s180
        %p182 = pneg %p40
        %p183 = pneg %p37
        %p184 = pneg %p61
        %p185 = pneg %p58
        %p186 = pneg %p87
        %p187 = pneg %p84
        %s188 = smul.u32 8, %s19
        %p189 = scmp.lt.s32.totalorder %s188, 15
        %s190 = scalar_select %p189, %s188, 15
        %s191 = smul.addr %s190, 8
        %s192 = scalar_lea.vmem %s2, %s191
        %p193 = pneg %p113
        %p194 = pneg %p110
        %s195 = smul.u32 8, %s19
        %p196 = scmp.lt.s32.totalorder %s195, 15
        %s197 = scalar_select %p196, %s195, 15
        %s198 = smul.addr %s197, 8
        %s199 = scalar_lea.vmem %s3, %s198
        %p200 = pneg %p139
        %p201 = pneg %p136
        %s202 = sand.u32 %s126, 1
        %s203 = scalar_lea.sflag [#allocation3], %s202
        %s204 = sand.u32 %s126, 1
        %s205 = smul.addr %s204, 2
        %s206 = scalar_lea.vmem [#allocation2], %s205
        %s207 = smul.u32 8, %s19
        %p208 = scmp.lt.s32.totalorder %s207, 15
        %s209 = scalar_select %p208, %s207, 15
        %s210 = smul.addr %s209, 4
        %s211 = scalar_lea.vmem %s0, %s210
        %s212 = smul.u32 8, %s19
        %s213 = smul.u32 8, %s19
        %p214 = scmp.lt.s32.totalorder %s213, 15
        %s215 = scalar_select %p214, %s213, 15
        %s216 = smul.addr %s215, 8
        %s217 = scalar_lea.vmem %s2, %s216
        %s218 = smul.u32 8, %s19
        %s219 = smul.u32 8, %s19
        %p220 = scmp.lt.s32.totalorder %s219, 15
        %s221 = scalar_select %p220, %s219, 15
        %s222 = smul.addr %s221, 8
        %s223 = scalar_lea.vmem %s3, %s222
        %s224 = smul.u32 8, %s19
        %v226 = vld [vmem:[%s211] sm:$0xf]
        %v227 = vld [vmem:[%s211 + $0x4] sm:$0xf]
        %v228 = vld [vmem:[%s211 + $0x8] sm:$0xf]
        %v229 = vld [vmem:[%s211 + $0xc] sm:$0xf]
        %v230 = vld [vmem:[%s211 + $0x10] sm:$0xf]
        %v231 = vld [vmem:[%s211 + $0x14] sm:$0xf]
        %v232 = vld [vmem:[%s211 + $0x18] sm:$0xf]
        %v233 = vld [vmem:[%s211 + $0x1c] sm:$0xf]
        %v234 = vld [vmem:[%s1] sm:$0xf]
        %v235 = vld [vmem:[%s1 + $0x4] sm:$0xf]
        %v244 = vunpack.c.l.b16 %v226
        %v245 = vunpack.c.l.b16 %v227
        %v246 = vunpack.c.l.b16 %v228
        %v247 = vunpack.c.l.b16 %v229
        %v248 = vunpack.c.l.b16 %v230
        %v249 = vunpack.c.l.b16 %v231
        %v250 = vunpack.c.l.b16 %v232
        %v251 = vunpack.c.l.b16 %v233
        %v252 = vpack.c.b16 %v245, %v244
        %v253 = vpack.c.b16 %v247, %v246
        %v254 = vpack.c.b16 %v249, %v248
        %v255 = vpack.c.b16 %v251, %v250
        %v258 = vunpack.c.l.b16 %v234
        %v259 = vunpack.c.l.b16 %v235
        %v260 = vpack.c.b16 %v259, %v258
        %vm262 = vcmask 130048
        %v264 = vsel %vm262, %v252, 0
        %v267 = vsel %vm262, %v253, 0
        %v270 = vsel %vm262, %v254, 0
        %v273 = vsel %vm262, %v255, 0
        %275 = vmatprep.subr.bf16.mxu0 0
        %276 = vmatpush1.bf16.msra.mxu0 %v260
        %277 = vmatprep.subr.bf16.mxu0 0
        %278 = vmatpush1.bf16.msra.mxu0 0
        %279 = vmatprep.subr.bf16.mxu0 0
        %280 = vmatpush1.bf16.msra.mxu0 0
        %281 = vmatprep.subr.bf16.mxu0 0
        %282 = vmatpush1.bf16.msra.mxu0 0
        %283 = vmatprep.subr.bf16.mxu0 0
        %284 = vmatpush1.bf16.msra.mxu0 0
        %285 = vmatprep.subr.bf16.mxu0 0
        %286 = vmatpush1.bf16.msra.mxu0 0
        %287 = vmatprep.subr.bf16.mxu0 0
        %288 = vmatpush1.bf16.msra.mxu0 0
        %289 = vmatprep.subr.bf16.mxu0 0
        %290 = vmatpush1.bf16.msra.mxu0 0
        %291 = vmatprep.subr.bf16.mxu0 0
        %292 = vmatpush1.bf16.msra.mxu0 0
        %293 = vmatprep.subr.bf16.mxu0 0
        %294 = vmatpush1.bf16.msra.mxu0 0
        %295 = vmatprep.subr.bf16.mxu0 0
        %296 = vmatpush1.bf16.msra.mxu0 0
        %297 = vmatprep.subr.bf16.mxu0 0
        %298 = vmatpush1.bf16.msra.mxu0 0
        %299 = vmatprep.subr.bf16.mxu0 0
        %300 = vmatpush1.bf16.msra.mxu0 0
        %301 = vmatprep.subr.bf16.mxu0 0
        %302 = vmatpush1.bf16.msra.mxu0 0
        %303 = vmatprep.subr.bf16.mxu0 0
        %304 = vmatpush1.bf16.msra.mxu0 0
        %305 = vmatprep.subr.bf16.mxu0 0
        %306 = vmatpush1.bf16.msra.mxu0 0
        %307 = vmatprep.mubr.bf16.mxu0 0
        %308 = vmatmul.mubr.bf16.gmra.mrb[0].mxu0 %v264
        %v309 = vpop.f32.mrb[0].mxu0
        %v310 = vadd.f32 0.0, %v309
        %v311 = vpop.f32.mrb[0].mxu0
        %v312 = vpop.f32.mrb[0].mxu0
        %v313 = vadd.f32 0.0, %v312
        %v314 = vpop.f32.mrb[0].mxu0
        %315 = vmatprep.mubr.bf16.mxu0 0
        %316 = vmatmul.mubr.bf16.gmra.mrb[0].mxu0 %v267
        %v317 = vpop.f32.mrb[0].mxu0
        %v318 = vadd.f32 0.0, %v317
        %v319 = vpop.f32.mrb[0].mxu0
        %v320 = vpop.f32.mrb[0].mxu0
        %v321 = vadd.f32 0.0, %v320
        %v322 = vpop.f32.mrb[0].mxu0
        %323 = vmatprep.mubr.bf16.mxu0 0
        %324 = vmatmul.mubr.bf16.gmra.mrb[0].mxu0 %v270
        %v325 = vpop.f32.mrb[0].mxu0
        %v326 = vadd.f32 0.0, %v325
        %v327 = vpop.f32.mrb[0].mxu0
        %v328 = vpop.f32.mrb[0].mxu0
        %v329 = vadd.f32 0.0, %v328
        %v330 = vpop.f32.mrb[0].mxu0
        %331 = vmatprep.mubr.bf16.mxu0 0
        %332 = vmatmul.mubr.bf16.gmra.mrb[0].mxu0 %v273
        %v333 = vpop.f32.mrb[0].mxu0
        %v334 = vadd.f32 0.0, %v333
        %v335 = vpop.f32.mrb[0].mxu0
        %v336 = vpop.f32.mrb[0].mxu0
        %v337 = vadd.f32 0.0, %v336
        %v338 = vpop.f32.mrb[0].mxu0
        %339 = vdwg.mxu0
        %vm340 = vcmask 64512
        %341 = vst.msk [vmem:[%s217] sm:$0xff] %vm340, %v310
        %342 = vst.msk [vmem:[%s217 + $0x8] sm:$0xff] %vm340, %v313
        %343 = vst.msk [vmem:[%s217 + $0x10] sm:$0xff] %vm340, %v318
        %344 = vst.msk [vmem:[%s217 + $0x18] sm:$0xff] %vm340, %v321
        %345 = vst.msk [vmem:[%s217 + $0x20] sm:$0xff] %vm340, %v326
        %346 = vst.msk [vmem:[%s217 + $0x28] sm:$0xff] %vm340, %v329
        %347 = vst.msk [vmem:[%s217 + $0x30] sm:$0xff] %vm340, %v334
        %348 = vst.msk [vmem:[%s217 + $0x38] sm:$0xff] %vm340, %v337
        %357 = vrot.lane.b32.xlu0 %v310, 120
        %v358 = vpop.permute.xlu0 %357
        %359 = vrot.lane.b32.xlu0 %v313, 120
        %v360 = vpop.permute.xlu0 %359
        %361 = vrot.lane.b32.xlu0 %v318, 120
        %v362 = vpop.permute.xlu0 %361
        %363 = vrot.lane.b32.xlu0 %v321, 120
        %v364 = vpop.permute.xlu0 %363
        %365 = vrot.lane.b32.xlu0 %v326, 120
        %v366 = vpop.permute.xlu0 %365
        %367 = vrot.lane.b32.xlu0 %v329, 120
        %v368 = vpop.permute.xlu0 %367
        %369 = vrot.lane.b32.xlu0 %v334, 120
        %v370 = vpop.permute.xlu0 %369
        %371 = vrot.lane.b32.xlu0 %v337, 120
        %v372 = vpop.permute.xlu0 %371
        %vm381 = vcmask 261120
        %382 = vst.msk [vmem:[%s223] sm:$0xff] %vm381, %v358
        %383 = vst.msk [vmem:[%s223 + $0x8] sm:$0xff] %vm381, %v360
        %384 = vst.msk [vmem:[%s223 + $0x10] sm:$0xff] %vm381, %v362
        %385 = vst.msk [vmem:[%s223 + $0x18] sm:$0xff] %vm381, %v364
        %386 = vst.msk [vmem:[%s223 + $0x20] sm:$0xff] %vm381, %v366
        %387 = vst.msk [vmem:[%s223 + $0x28] sm:$0xff] %vm381, %v368
        %388 = vst.msk [vmem:[%s223 + $0x30] sm:$0xff] %vm381, %v370
        %389 = vst.msk [vmem:[%s223 + $0x38] sm:$0xff] %vm381, %v372
        %vm390 = vcmask 326656
        %v391 = vsel %vm390, %v310, 0.0
        %v392 = vsel %vm390, %v313, 0.0
        %v393 = vadd.f32 %v391, %v392
        %v394 = vsel %vm390, %v318, 0.0
        %v395 = vadd.f32 %v393, %v394
        %v396 = vsel %vm390, %v321, 0.0
        %v397 = vadd.f32 %v395, %v396
        %v398 = vsel %vm390, %v326, 0.0
        %v399 = vadd.f32 %v397, %v398
        %v400 = vsel %vm390, %v329, 0.0
        %v401 = vadd.f32 %v399, %v400
        %v402 = vsel %vm390, %v334, 0.0
        %v403 = vadd.f32 %v401, %v402
        %v404 = vsel %vm390, %v337, 0.0
        %v405 = vadd.f32 %v403, %v404
        %v406 = vrot.slane %v405, 4
        %v407 = vadd.f32 %v405, %v406
        %v408 = vrot.slane %v407, 2
        %v409 = vadd.f32 %v407, %v408
        %v410 = vrot.slane %v409, 1
        %v411 = vadd.f32 %v409, %v410
        %v412 = vmul.f32 %v310, %v310
        %v413 = vmul.f32 %v313, %v313
        %v414 = vmul.f32 %v318, %v318
        %v415 = vmul.f32 %v321, %v321
        %v416 = vmul.f32 %v326, %v326
        %v417 = vmul.f32 %v329, %v329
        %v418 = vmul.f32 %v334, %v334
        %v419 = vmul.f32 %v337, %v337
        %v420 = vsel %vm390, %v412, 0.0
        %v421 = vsel %vm390, %v413, 0.0
        %v422 = vadd.f32 %v420, %v421
        %v423 = vsel %vm390, %v414, 0.0
        %v424 = vadd.f32 %v422, %v423
        %v425 = vsel %vm390, %v415, 0.0
        %v426 = vadd.f32 %v424, %v425
        %v427 = vsel %vm390, %v416, 0.0
        %v428 = vadd.f32 %v426, %v427
        %v429 = vsel %vm390, %v417, 0.0
        %v430 = vadd.f32 %v428, %v429
        %v431 = vsel %vm390, %v418, 0.0
        %v432 = vadd.f32 %v430, %v431
        %v433 = vsel %vm390, %v419, 0.0
        %v434 = vadd.f32 %v432, %v433
        %v435 = vrot.slane %v434, 4
        %v436 = vadd.f32 %v434, %v435
        %v437 = vrot.slane %v436, 2
        %v438 = vadd.f32 %v436, %v437
        %v439 = vrot.slane %v438, 1
        %v440 = vadd.f32 %v438, %v439
        %vm441 = vcmask 1040384
        %v442 = vsel %vm441, %v411, %v440
        %vm443 = vcmask 320512
        %444 = vst.msk [vmem:[%s206] sm:$0x3] %vm443, %v442
        %s445 = smul.u32 8, %s19
        %p446 = scmp.lt.s32.totalorder %s445, 15
        %s447 = scalar_select %p446, %s445, 15
        %s448 = smul.addr %s447, 8
        %s449 = scalar_lea.vmem %s2, %s448
        %s450 = smul.u32 8, %s19
        %p451 = scmp.lt.s32.totalorder %s450, 15
        %s452 = scalar_select %p451, %s450, 15
        %s453 = smul.addr %s452, 8
        %s454 = scalar_lea.vmem %s3, %s453
        %s455 = sand.u32 %s126, 1
        %s456 = scalar_lea.sflag [#allocation3], %s455
        %s457 = sand.u32 %s126, 1
        %s458 = smul.addr %s457, 2
        %s459 = scalar_lea.vmem [#allocation2], %s458
        // Predicated region
        $region29: #{tpu_custom_call.1} parent=27 // pred_check
          %p460 = pneg %p84
        $region30: #{tpu_custom_call.1} parent=27 // pred_check_branch
          %462 = sbr.rel (%p460) target = $region32
        $region31: #{tpu_custom_call.1} parent=27 // pred_region
          %s463 = smul.u32 8, %s19
        $region32: #{tpu_custom_call.1} parent=27 // pred_fallthru
          _
        // Predicated region
        $region33: #{tpu_custom_call.1} parent=27 // pred_check
          %p464 = pneg %p110
        $region34: #{tpu_custom_call.1} parent=27 // pred_check_branch
          %466 = sbr.rel (%p464) target = $region36
        $region35: #{tpu_custom_call.1} parent=27 // pred_region
          %s467 = smul.u32 8, %s19
        $region36: #{tpu_custom_call.1} parent=27 // pred_fallthru
          _
        // Predicated region
        $region37: #{tpu_custom_call.1} parent=27 // pred_check
          %p468 = pneg %p136
        $region38: #{tpu_custom_call.1} parent=27 // pred_check_branch
          %470 = sbr.rel (%p468) target = $region40
        $region39: #{tpu_custom_call.1} parent=27 // pred_region
          %s472 = ssub.s32 32, 32
          %473 = vsyncadd %s456, %s472
          %s474 = smul.addr %s19, 32
          %s475 = scalar_lea.hbm %s4, %s474
          %s477 = sshll.u32 %s459, 4
          %s478 = int_to_ptr.vmem [resolvable:$true] %s477
          %480 = dma.vmem_to_hbm [thread:$0]  %s478, 32, %s475, %s456
        $region40: #{tpu_custom_call.1} parent=27 // pred_fallthru
          _
      $region28: #{tpu_custom_call.1} parent=5 // pred_fallthru
        _
      %p481 = scmp.le.s32.totalorder 2, %s14
      // Predicated region
      $region41: #{tpu_custom_call.1} parent=5 // pred_check
        %p482 = pneg %p481
      $region42: #{tpu_custom_call.1} parent=5 // pred_check_branch
        %484 = sbr.rel (%p482) target = $region44
      $region43: #{tpu_custom_call.1} parent=5 // pred_region
        %s485 = ssub.s32 %s14, 2
        // Predicated region
        $region45: #{tpu_custom_call.1} parent=43 // pred_check
          %p486 = pneg %p90
        $region46: #{tpu_custom_call.1} parent=43 // pred_check_branch
          %488 = sbr.rel (%p486) target = $region48
        $region47: #{tpu_custom_call.1} parent=43 // pred_region
          %s489 = smul.u32 8, %s20
          %p490 = scmp.lt.s32.totalorder %s489, 15
          %s491 = scalar_select %p490, %s489, 15
          %s492 = smul.addr %s491, 8
          %s493 = scalar_lea.vmem %s2, %s492
        $region48: #{tpu_custom_call.1} parent=43 // pred_fallthru
          _
        // Predicated region
        $region49: #{tpu_custom_call.1} parent=43 // pred_check
          %p494 = pneg %p116
        $region50: #{tpu_custom_call.1} parent=43 // pred_check_branch
          %496 = sbr.rel (%p494) target = $region52
        $region51: #{tpu_custom_call.1} parent=43 // pred_region
          %s497 = smul.u32 8, %s20
          %p498 = scmp.lt.s32.totalorder %s497, 15
          %s499 = scalar_select %p498, %s497, 15
          %s500 = smul.addr %s499, 8
          %s501 = scalar_lea.vmem %s3, %s500
        $region52: #{tpu_custom_call.1} parent=43 // pred_fallthru
          _
        // Predicated region
        $region53: #{tpu_custom_call.1} parent=43 // pred_check
          %p502 = pneg %p142
        $region54: #{tpu_custom_call.1} parent=43 // pred_check_branch
          %504 = sbr.rel (%p502) target = $region56
        $region55: #{tpu_custom_call.1} parent=43 // pred_region
          %s505 = sand.u32 %s127, 1
          %s506 = scalar_lea.sflag [#allocation3], %s505
          %s507 = sand.u32 %s127, 1
          %s508 = smul.addr %s507, 2
          %s509 = scalar_lea.vmem [#allocation2], %s508
          %510 = dma.done %s506, 32
        $region56: #{tpu_custom_call.1} parent=43 // pred_fallthru
          _
      $region44: #{tpu_custom_call.1} parent=5 // pred_fallthru
        _
    $region6: #{tpu_custom_call.1} parent=1 // loop_footer
      %s18 = sadd.s32 1, %s14
    $region7: #{tpu_custom_call.1} parent=1 // loop_footer_branch
      %13 = sbr.rel target = $region3
    $region8: #{tpu_custom_call.1} parent=1 // loop_exit
      _
    %511 = vsyncpa [#allocation3], 1
    %s512 = scalar_lea.sflag [#allocation3], 1
    %513 = vsyncpa %s512, 1

</llo_original>
